<compile_context>
chip_gen: v6e
topology: v6e:2x2x1
jax: 0.10.0
libtpu: 0.0.40
codegen_flags: <defaults>
</compile_context>

<pallas_src>
import functools

import jax
import jax.numpy as jnp
from jax import lax
from jax.experimental import pallas as pl
from jax.experimental.pallas import tpu as pltpu


def mlp_kernel(x_ref, w1_ref, w2_ref, w3_ref, o_ref):
    """One batch tile of the fused MLP.

    x_ref : (tb, input_dim)        f32  batch-major activation tile (raw HBM layout)
    w1_ref: (input_dim, input_dim) bf16 PyTorch (out, in) layout, VMEM-resident
    w2_ref: (hidden=4, input_dim)  bf16
    w3_ref: (output_dim, 4)        bf16
    o_ref : (output_dim, tb)       f32  feature-major, lane-dense store
    """
    x = x_ref[...].astype(jnp.bfloat16)

    # layer 1: contract the feature axis of W1 (axis 1) with x (axis 1)
    #          -> (input_dim, tb) feature-major, f32 accumulate on the MXU.
    h1 = lax.dot_general(
        w1_ref[...], x,
        dimension_numbers=(((1,), (1,)), ((), ())),
        preferred_element_type=jnp.float32)
    # cast first, ReLU in bf16 (half the vregs on v6e/v7x; same result).
    h1 = jnp.maximum(h1.astype(jnp.bfloat16), 0)

    # layer 2: (4, in) @ (in, tb) -> (4, tb)
    h2 = jnp.dot(w2_ref[...], h1, preferred_element_type=jnp.float32)
    h2 = jnp.maximum(h2.astype(jnp.bfloat16), 0)

    # layer 3: (out, 4) @ (4, tb) -> (out, tb)
    out = jnp.dot(w3_ref[...], h2, preferred_element_type=jnp.float32)
    o_ref[...] = out.astype(o_ref.dtype)


def _choose_tiling(batch, max_tb):
    """Lane-aligned batch tile: as big as possible (cap max_tb), but keep >=2
    even grid steps when the batch allows so the parallel axis shards across
    v7x's two TensorCores."""
    lane = 128
    bp = ((batch + lane - 1) // lane) * lane
    if bp <= max_tb:
        if bp >= 2 * lane and bp % (2 * lane) == 0:
            tb = bp // 2
        else:
            tb = bp
    else:
        tb = max_tb
        bp = ((bp + tb - 1) // tb) * tb
    return bp, tb, bp // tb


@functools.partial(jax.jit, static_argnames=("max_tb",))
def my_model_forward(x, w1, w2, w3, *, max_tb=2048):
    """Forward pass of My_Model.

    x : (B, input_dim) float32, batch-major (PyTorch convention, fed to the
        kernel untouched — no wrapper-side transpose/cast pass over HBM)
    w1: (input_dim, input_dim)  nn.Linear weight, (out, in) layout (bf16 preferred)
    w2: (hidden=4, input_dim)
    w3: (output_dim, 4)
    returns (B, output_dim) float32
    """
    B, input_dim = x.shape
    hidden_dim = w2.shape[0]
    output_dim = w3.shape[0]

    Bp, tb, n_tiles = _choose_tiling(B, max_tb)
    if Bp != B:
        # only touched when B is not lane-aligned; zero rows flow through
        # ReLU/matmuls harmlessly and are sliced off below.
        x = jnp.pad(x, ((0, Bp - B), (0, 0)))

    # no-op if weights were precast to bf16 at model setup (hot-path friendly)
    w1b = jnp.asarray(w1, jnp.bfloat16)
    w2b = jnp.asarray(w2, jnp.bfloat16)
    w3b = jnp.asarray(w3, jnp.bfloat16)

    flops = 2 * Bp * (input_dim * input_dim
                      + input_dim * hidden_dim
                      + hidden_dim * output_dim)
    bytes_accessed = (x.size * x.dtype.itemsize
                      + (w1b.size + w2b.size + w3b.size) * 2
                      + Bp * output_dim * 4)

    out_fm = pl.pallas_call(
        mlp_kernel,
        out_shape=jax.ShapeDtypeStruct((output_dim, Bp), jnp.float32),
        grid=(n_tiles,),
        in_specs=[
            # batch-tiled activation, raw batch-major HBM layout
            # (if DMA ever shows exposed on v5e, bump pipeline_mode=pl.Buffered(3)
            #  here instead of shrinking the tile)
            pl.BlockSpec((tb, input_dim), lambda i: (i, 0)),
            # weights: full arrays, constant block index -> stay VMEM-resident
            pl.BlockSpec(w1b.shape, lambda i: (0, 0)),
            pl.BlockSpec(w2b.shape, lambda i: (0, 0)),
            pl.BlockSpec(w3b.shape, lambda i: (0, 0)),
        ],
        # feature-major, lane-dense output tile (last dim = tb, multiple of 128)
        out_specs=pl.BlockSpec((output_dim, tb), lambda i: (0, i)),
        compiler_params=pltpu.CompilerParams(
            # batch tiles are independent -> megacore sharding on v7x
            dimension_semantics=("parallel",),
        ),
        cost_estimate=pl.CostEstimate(
            flops=flops, transcendentals=0, bytes_accessed=bytes_accessed),
    )(x, w1b, w2b, w3b)

    # tiny (output_dim, B) transpose back to batch-major; drop batch padding
    return out_fm[:, :B].T


def reference_forward_bf16(x, w1, w2, w3):
    """Reference with the same bf16-input / f32-accumulate numerics as the kernel."""
    xb = x.astype(jnp.bfloat16)
    w1b, w2b, w3b = (w.astype(jnp.bfloat16) for w in (w1, w2, w3))
    h1 = jnp.maximum(jnp.dot(xb, w1b.T, preferred_element_type=jnp.float32), 0.0)
    h2 = jnp.maximum(
        jnp.dot(h1.astype(jnp.bfloat16), w2b.T, preferred_element_type=jnp.float32), 0.0)
    return jnp.dot(h2.astype(jnp.bfloat16), w3b.T, preferred_element_type=jnp.float32)


def reference_forward_f32(x, w1, w2, w3):
    h1 = jnp.maximum(x @ w1.T, 0.0)
    h2 = jnp.maximum(h1 @ w2.T, 0.0)
    return h2 @ w3.T


if __name__ == "__main__":
    key = jax.random.PRNGKey(0)
    batch = 256          # -> tb=128, two "parallel" grid steps
    input_dim = 32
    output_dim = 8

    k_x, k_w1, k_w2, k_w3 = jax.random.split(key, 4)
    x = jax.random.normal(k_x, (batch, input_dim), dtype=jnp.float32)

    # Deterministic weight init mimicking nn.Linear (uniform +/- 1/sqrt(fan_in)),
    # stored PyTorch-style (out, in) and used directly by the kernel.
    def linear_w(k, out_f, in_f):
        bound = 1.0 / (in_f ** 0.5)
        return jax.random.uniform(k, (out_f, in_f), jnp.float32, -bound, bound)

    w1 = linear_w(k_w1, input_dim, input_dim)   # (input_dim, input_dim)
    w2 = linear_w(k_w2, 4, input_dim)           # (4, input_dim)
    w3 = linear_w(k_w3, output_dim, 4)          # (output_dim, 4)

    # precast weights once at "model setup" so the hot path does no casting
    w1b = w1.astype(jnp.bfloat16)
    w2b = w2.astype(jnp.bfloat16)
    w3b = w3.astype(jnp.bfloat16)

    out = my_model_forward(x, w1b, w2b, w3b)
    out = jax.block_until_ready(out)

    assert out.shape == (batch, output_dim)

    ref_bf16 = reference_forward_bf16(x, w1, w2, w3)
    assert jnp.allclose(out, ref_bf16, atol=1e-3, rtol=1e-3), "mismatch vs bf16 reference"

    ref_f32 = reference_forward_f32(x, w1, w2, w3)
    assert jnp.allclose(out, ref_f32, atol=5e-2, rtol=5e-2), "mismatch vs f32 reference"

    # NOTE: at this problem size the kernel is still overhead-bound; the design
    # (large lane tiles, no wrapper plumbing) pays off as batch grows.
    print("KERNEL_OK")
</pallas_src>

<mosaic_0001>
module attributes {stable_mosaic.version = 11 : i64} {
  func.func @mlp_kernel(%arg0: i32, %arg1: memref<128x32xf32, #tpu.memory_space<vmem>>, %arg2: memref<32x32xbf16, #tpu.memory_space<vmem>>, %arg3: memref<4x32xbf16, #tpu.memory_space<vmem>>, %arg4: memref<8x4xbf16, #tpu.memory_space<vmem>>, %arg5: memref<8x128xf32, #tpu.memory_space<vmem>>) attributes {dimension_semantics = [#tpu.dimension_semantics<parallel>], iteration_bounds = array<i64: 2>, scalar_prefetch = 0 : i64, scratch_operands = 0 : i64, tpu.core_type = #tpu.core_type<tc>, window_params = [{transform_indices = @transform_0, window_bounds = array<i64: 128, 32>}, {pipeline_mode = #tpu.pipeline_mode<synchronous>, transform_indices = @transform_1, window_bounds = array<i64: 32, 32>}, {pipeline_mode = #tpu.pipeline_mode<synchronous>, transform_indices = @transform_2, window_bounds = array<i64: 4, 32>}, {pipeline_mode = #tpu.pipeline_mode<synchronous>, transform_indices = @transform_3, window_bounds = array<i64: 8, 4>}, {transform_indices = @transform_4, window_bounds = array<i64: 8, 128>}]} {
    %c0 = arith.constant 0 : index
    %c0_0 = arith.constant 0 : index
    %0 = vector.load %arg1[%c0, %c0_0] : memref<128x32xf32, #tpu.memory_space<vmem>>, vector<128x32xf32>
    %1 = arith.truncf %0 : vector<128x32xf32> to vector<128x32xbf16>
    %c0_1 = arith.constant 0 : index
    %c0_2 = arith.constant 0 : index
    %2 = vector.load %arg2[%c0_1, %c0_2] : memref<32x32xbf16, #tpu.memory_space<vmem>>, vector<32x32xbf16>
    %cst = arith.constant dense<0.000000e+00> : vector<32x128xf32>
    %3 = tpu.matmul %2, %1, %cst {dimension_numbers = #tpu.dot_dimension_numbers<[1], [1], [0], [0], [0, 0, 1, 0], [], []>} : vector<32x32xbf16>, vector<128x32xbf16>, vector<32x128xf32> -> vector<32x128xf32>
    %4 = arith.truncf %3 : vector<32x128xf32> to vector<32x128xbf16>
    %cst_3 = arith.constant 0.000000e+00 : bf16
    %5 = vector.broadcast %cst_3 : bf16 to vector<32x128xbf16>
    %6 = arith.maximumf %4, %5 : vector<32x128xbf16>
    %c0_4 = arith.constant 0 : index
    %c0_5 = arith.constant 0 : index
    %7 = vector.load %arg3[%c0_4, %c0_5] : memref<4x32xbf16, #tpu.memory_space<vmem>>, vector<4x32xbf16>
    %cst_6 = arith.constant dense<0.000000e+00> : vector<4x128xf32>
    %8 = tpu.matmul %7, %6, %cst_6 {dimension_numbers = #tpu.dot_dimension_numbers<[1], [0], [0], [1], [0, 0, 1, 1], [], []>} : vector<4x32xbf16>, vector<32x128xbf16>, vector<4x128xf32> -> vector<4x128xf32>
    %9 = arith.truncf %8 : vector<4x128xf32> to vector<4x128xbf16>
    %cst_7 = arith.constant 0.000000e+00 : bf16
    %10 = vector.broadcast %cst_7 : bf16 to vector<4x128xbf16>
    %11 = arith.maximumf %9, %10 : vector<4x128xbf16>
    %c0_8 = arith.constant 0 : index
    %c0_9 = arith.constant 0 : index
    %12 = vector.load %arg4[%c0_8, %c0_9] : memref<8x4xbf16, #tpu.memory_space<vmem>>, vector<8x4xbf16>
    %cst_10 = arith.constant dense<0.000000e+00> : vector<8x128xf32>
    %13 = tpu.matmul %12, %11, %cst_10 {dimension_numbers = #tpu.dot_dimension_numbers<[1], [0], [0], [1], [0, 0, 1, 1], [], []>} : vector<8x4xbf16>, vector<4x128xbf16>, vector<8x128xf32> -> vector<8x128xf32>
    %c0_11 = arith.constant 0 : index
    %c0_12 = arith.constant 0 : index
    %14 = vector.load %arg5[%c0_11, %c0_12] : memref<8x128xf32, #tpu.memory_space<vmem>>, vector<8x128xf32>
    tpu.vector_store %arg5[%c0_11, %c0_12], %13 {strides = array<i32>} : memref<8x128xf32, #tpu.memory_space<vmem>>, vector<8x128xf32>,
    return
  }
  func.func @transform_0(%arg0: i32) -> (i32, i32) {
    %c0_i32 = arith.constant 0 : i32
    %c0_i32_0 = arith.constant 0 : i32
    return %arg0, %c0_i32 : i32, i32
  }
  func.func @transform_1(%arg0: i32) -> (i32, i32) {
    %c0_i32 = arith.constant 0 : i32
    %c0_i32_0 = arith.constant 0 : i32
    %c0_i32_1 = arith.constant 0 : i32
    return %c0_i32, %c0_i32_0 : i32, i32
  }
  func.func @transform_2(%arg0: i32) -> (i32, i32) {
    %c0_i32 = arith.constant 0 : i32
    %c0_i32_0 = arith.constant 0 : i32
    %c0_i32_1 = arith.constant 0 : i32
    return %c0_i32, %c0_i32_0 : i32, i32
  }
  func.func @transform_3(%arg0: i32) -> (i32, i32) {
    %c0_i32 = arith.constant 0 : i32
    %c0_i32_0 = arith.constant 0 : i32
    %c0_i32_1 = arith.constant 0 : i32
    return %c0_i32, %c0_i32_0 : i32, i32
  }
  func.func @transform_4(%arg0: i32) -> (i32, i32) {
    %c0_i32 = arith.constant 0 : i32
    %c0_i32_0 = arith.constant 0 : i32
    return %c0_i32, %arg0 : i32, i32
  }
}

</mosaic_0001>

<llo_original>
// kernel: my_model_forward.1
$region0: #{my_model_forward.1}
  #allocation0 [shape = 'u32[]', space=smem, size = 0x4, offset = 0x4, fixed_abs, tag = 'smem constant byte address 0x4 - core index']
  #allocation1 [shape = 'u32[144,128]{1,0:T(1,128)}', space=vmem, size = 0x12000, scoped, tag = 'internal scratch']
  %s0 = inlined_call_operand.vmem [shape: f32[256,32], index: 0, kind: input, shape index: {}]
  %s1 = inlined_call_operand.vmem [shape: bf16[32,32], index: 1, kind: input, shape index: {}]
  %s2 = inlined_call_operand.vmem [shape: bf16[4,32], index: 2, kind: input, shape index: {}]
  %s3 = inlined_call_operand.vmem [shape: bf16[8,4], index: 3, kind: input, shape index: {}]
  %s4 = inlined_call_operand.hbm [shape: f32[8,256], index: 4, kind: output, shape index: {}]
  %s5 = sld [smem:[#allocation0]]
  $region49: #{my_model_forward.1} parent=0
    _
  %s7 = ssub.s32 1, %s5
  %s8 = scalar_select 0, %s7, %s5
  $region1: #{my_model_forward.1} parent=0
    #allocation2 [shape = 'u8[8192]{0}', space=vmem, size = 0x2000, scoped, tag = 'output window, operand 0']
    #allocation3 [shape = 's32[2]{0}', space=sflag, size = 0x8, scoped, tag = 'scoped memory for my_model_forward.1']
    %9 = vsyncpa [#allocation3], 0
    %s10 = scalar_lea.sflag [#allocation3], 1
    %11 = vsyncpa %s10, 0
    loop: start=0, step=1, limit=4
    $region2: #{my_model_forward.1} parent=1 // loop_pre_header
      _
    $region3: #{my_model_forward.1} parent=1 // loop_header
      %s13 = sphi 0, %s17
      %p14 = scmp.ge.s32.totalorder %s13, 4
      %s23 = sphi 0, %s25
      %s26 = sphi 0, %s23
      %s27 = sphi 0, %s26
      %s43 = sphi 0, %s27
      %s47 = sphi 0, %s47
      %s49 = sphi 0, %s47
      %s50 = sphi 0, %s49
      %s64 = sphi 0, %s50
      %s68 = sphi 0, %s68
      %s70 = sphi 0, %s68
      %s71 = sphi 0, %s70
      %s85 = sphi 0, %s71
      %s89 = sphi 0, %s89
      %s91 = sphi 0, %s89
      %s92 = sphi 0, %s91
      %s106 = sphi 0, %s92
      %s112 = sphi 0, %s114
      %s115 = sphi 0, %s112
      %s116 = sphi 0, %s115
      %s132 = sphi 0, %s116
    $region4: #{my_model_forward.1} parent=1 // loop_header_branch
      %16 = sbr.rel (%p14) target = $region8
    $region5: #{my_model_forward.1} parent=1 // loop_body
      %s18 = ssub.s32 %s13, 1
      %s19 = ssub.s32 %s13, 2
      %s20 = sadd.s32 %s13, 1
      %s21 = ssub.s32 %s13, %s20
      %p22 = scmp.eq.s32.totalorder %s21, 0
      %s24 = sadd.s32 %s23, 1
      %s25 = scalar_select %p22, %s23, %s24
      %p28 = pneg %p22
      %p29 = scmp.eq.s32.totalorder %s13, 1
      %p30 = por %p28, %p29
      %p31 = scmp.ne.s32.totalorder %s23, %s26
      %p32 = scmp.eq.s32.totalorder %s13, 0
      %p33 = por %p31, %p32
      %p34 = scmp.ne.s32.totalorder %s23, %s26
      %p35 = scmp.eq.s32.totalorder %s18, 1
      %p36 = por %p34, %p35
      %p37 = scmp.ne.s32.totalorder %s26, %s27
      %p38 = scmp.eq.s32.totalorder %s18, 0
      %p39 = por %p37, %p38
      %p40 = scmp.ne.s32.totalorder %s26, %s27
      %p41 = scmp.eq.s32.totalorder %s19, 1
      %p42 = por %p40, %p41
      %p44 = scmp.ne.s32.totalorder %s27, %s43
      %p45 = scmp.eq.s32.totalorder %s19, 0
      %p46 = por %p44, %p45
      %s48 = sadd.s32 %s47, 1
      %p51 = scmp.eq.s32.totalorder %s13, 1
      %p52 = scmp.ne.s32.totalorder %s47, %s49
      %p53 = scmp.eq.s32.totalorder %s13, 0
      %p54 = por %p52, %p53
      %p55 = scmp.ne.s32.totalorder %s47, %s49
      %p56 = scmp.eq.s32.totalorder %s18, 1
      %p57 = por %p55, %p56
      %p58 = scmp.ne.s32.totalorder %s49, %s50
      %p59 = scmp.eq.s32.totalorder %s18, 0
      %p60 = por %p58, %p59
      %p61 = scmp.ne.s32.totalorder %s49, %s50
      %p62 = scmp.eq.s32.totalorder %s19, 1
      %p63 = por %p61, %p62
      %p65 = scmp.ne.s32.totalorder %s50, %s64
      %p66 = scmp.eq.s32.totalorder %s19, 0
      %p67 = por %p65, %p66
      %s69 = sadd.s32 %s68, 1
      %p72 = scmp.eq.s32.totalorder %s13, 1
      %p73 = scmp.ne.s32.totalorder %s68, %s70
      %p74 = scmp.eq.s32.totalorder %s13, 0
      %p75 = por %p73, %p74
      %p76 = scmp.ne.s32.totalorder %s68, %s70
      %p77 = scmp.eq.s32.totalorder %s18, 1
      %p78 = por %p76, %p77
      %p79 = scmp.ne.s32.totalorder %s70, %s71
      %p80 = scmp.eq.s32.totalorder %s18, 0
      %p81 = por %p79, %p80
      %p82 = scmp.ne.s32.totalorder %s70, %s71
      %p83 = scmp.eq.s32.totalorder %s19, 1
      %p84 = por %p82, %p83
      %p86 = scmp.ne.s32.totalorder %s71, %s85
      %p87 = scmp.eq.s32.totalorder %s19, 0
      %p88 = por %p86, %p87
      %s90 = sadd.s32 %s89, 1
      %p93 = scmp.eq.s32.totalorder %s13, 1
      %p94 = scmp.ne.s32.totalorder %s89, %s91
      %p95 = scmp.eq.s32.totalorder %s13, 0
      %p96 = por %p94, %p95
      %p97 = scmp.ne.s32.totalorder %s89, %s91
      %p98 = scmp.eq.s32.totalorder %s18, 1
      %p99 = por %p97, %p98
      %p100 = scmp.ne.s32.totalorder %s91, %s92
      %p101 = scmp.eq.s32.totalorder %s18, 0
      %p102 = por %p100, %p101
      %p103 = scmp.ne.s32.totalorder %s91, %s92
      %p104 = scmp.eq.s32.totalorder %s19, 1
      %p105 = por %p103, %p104
      %p107 = scmp.ne.s32.totalorder %s92, %s106
      %p108 = scmp.eq.s32.totalorder %s19, 0
      %p109 = por %p107, %p108
      %s110 = ssub.s32 %s13, %s20
      %p111 = scmp.eq.s32.totalorder %s110, 0
      %s113 = sadd.s32 %s112, 1
      %s114 = scalar_select %p111, %s112, %s113
      %p117 = pneg %p111
      %p118 = scmp.eq.s32.totalorder %s13, 1
      %p119 = por %p117, %p118
      %p120 = scmp.ne.s32.totalorder %s112, %s115
      %p121 = scmp.eq.s32.totalorder %s13, 0
      %p122 = por %p120, %p121
      %p123 = scmp.ne.s32.totalorder %s112, %s115
      %p124 = scmp.eq.s32.totalorder %s18, 1
      %p125 = por %p123, %p124
      %p126 = scmp.ne.s32.totalorder %s115, %s116
      %p127 = scmp.eq.s32.totalorder %s18, 0
      %p128 = por %p126, %p127
      %p129 = scmp.ne.s32.totalorder %s115, %s116
      %p130 = scmp.eq.s32.totalorder %s19, 1
      %p131 = por %p129, %p130
      %p133 = scmp.ne.s32.totalorder %s116, %s132
      %p134 = scmp.eq.s32.totalorder %s19, 0
      %p135 = por %p133, %p134
      %p136 = scmp.le.s32.totalorder 1, %s13
      %p137 = scmp.lt.s32.totalorder %s13, 3
      %p138 = pnand %p136, %p137
      %p139 = pneg %p138
      // Predicated region
      $region9: #{my_model_forward.1} parent=5 // pred_check
        _
      $region10: #{my_model_forward.1} parent=5 // pred_check_branch
        %141 = sbr.rel (%p138) target = $region12
      $region11: #{my_model_forward.1} parent=5 // pred_region
        %s142 = ssub.s32 %s13, 1
        // Predicated region
        $region13: #{my_model_forward.1} parent=11 // pred_check
          %p143 = pneg %p60
        $region14: #{my_model_forward.1} parent=11 // pred_check_branch
          %145 = sbr.rel (%p143) target = $region16
        $region15: #{my_model_forward.1} parent=11 // pred_region
          _
        $region16: #{my_model_forward.1} parent=11 // pred_fallthru
          _
        // Predicated region
        $region17: #{my_model_forward.1} parent=11 // pred_check
          %p146 = pneg %p81
        $region18: #{my_model_forward.1} parent=11 // pred_check_branch
          %148 = sbr.rel (%p146) target = $region20
        $region19: #{my_model_forward.1} parent=11 // pred_region
          _
        $region20: #{my_model_forward.1} parent=11 // pred_fallthru
          _
        // Predicated region
        $region21: #{my_model_forward.1} parent=11 // pred_check
          %p149 = pneg %p102
        $region22: #{my_model_forward.1} parent=11 // pred_check_branch
          %151 = sbr.rel (%p149) target = $region24
        $region23: #{my_model_forward.1} parent=11 // pred_region
          _
        $region24: #{my_model_forward.1} parent=11 // pred_fallthru
          _
      $region12: #{my_model_forward.1} parent=5 // pred_fallthru
        _
      %p152 = scmp.lt.s32.totalorder %s13, 2
      // Predicated region
      $region25: #{my_model_forward.1} parent=5 // pred_check
        %p153 = pneg %p152
      $region26: #{my_model_forward.1} parent=5 // pred_check_branch
        %155 = sbr.rel (%p153) target = $region28
      $region27: #{my_model_forward.1} parent=5 // pred_region
        // Predicated region
        $region29: #{my_model_forward.1} parent=27 // pred_check
          %p156 = pneg %p33
        $region30: #{my_model_forward.1} parent=27 // pred_check_branch
          %158 = sbr.rel (%p156) target = $region32
        $region31: #{my_model_forward.1} parent=27 // pred_region
          %s159 = smul.u32 16, %s13
          %p160 = scmp.lt.s32.totalorder %s159, 31
          %s161 = scalar_select %p160, %s159, 31
          %s162 = smul.addr %s161, 8
          %s163 = scalar_lea.vmem %s0, %s162
          %s164 = smul.u32 16, %s13
        $region32: #{my_model_forward.1} parent=27 // pred_fallthru
          _
      $region28: #{my_model_forward.1} parent=5 // pred_fallthru
        _
      %p165 = scmp.le.s32.totalorder 1, %s13
      %p166 = scmp.lt.s32.totalorder %s13, 3
      %p167 = pnand %p165, %p166
      %p168 = pneg %p167
      // Predicated region
      $region33: #{my_model_forward.1} parent=5 // pred_check
        _
      $region34: #{my_model_forward.1} parent=5 // pred_check_branch
        %170 = sbr.rel (%p167) target = $region36
      $region35: #{my_model_forward.1} parent=5 // pred_region
        %s171 = ssub.s32 %s13, 1
        %s172 = smul.u32 16, %s18
        %p173 = scmp.lt.s32.totalorder %s172, 31
        %s174 = scalar_select %p173, %s172, 31
        %s175 = smul.addr %s174, 8
        %s176 = scalar_lea.vmem %s0, %s175
        %p177 = pneg %p39
        %p178 = pneg %p36
        %p179 = pneg %p60
        %p180 = pneg %p57
        %p181 = pneg %p81
        %p182 = pneg %p78
        %p183 = pneg %p102
        %p184 = pneg %p99
        %p185 = pneg %p128
        %p186 = pneg %p125
        %s187 = sand.u32 %s115, 1
        %s188 = scalar_lea.sflag [#allocation3], %s187
        %s189 = sand.u32 %s115, 1
        %s190 = smul.addr %s189, 8
        %s191 = scalar_lea.vmem [#allocation2], %s190
        %s192 = smul.u32 16, %s18
        %p193 = scmp.lt.s32.totalorder %s192, 31
        %s194 = scalar_select %p193, %s192, 31
        %s195 = smul.addr %s194, 8
        %s196 = scalar_lea.vmem %s0, %s195
        %s197 = smul.u32 16, %s18
        %v199 = vld [vmem:[%s196] sm:$0xff]
        %v200 = vld [vmem:[%s196 + $0x8] sm:$0xff]
        %v201 = vld [vmem:[%s196 + $0x10] sm:$0xff]
        %v202 = vld [vmem:[%s196 + $0x18] sm:$0xff]
        %v203 = vld [vmem:[%s196 + $0x20] sm:$0xff]
        %v204 = vld [vmem:[%s196 + $0x28] sm:$0xff]
        %v205 = vld [vmem:[%s196 + $0x30] sm:$0xff]
        %v206 = vld [vmem:[%s196 + $0x38] sm:$0xff]
        %v207 = vld [vmem:[%s196 + $0x40] sm:$0xff]
        %v208 = vld [vmem:[%s196 + $0x48] sm:$0xff]
        %v209 = vld [vmem:[%s196 + $0x50] sm:$0xff]
        %v210 = vld [vmem:[%s196 + $0x58] sm:$0xff]
        %v211 = vld [vmem:[%s196 + $0x60] sm:$0xff]
        %v212 = vld [vmem:[%s196 + $0x68] sm:$0xff]
        %v213 = vld [vmem:[%s196 + $0x70] sm:$0xff]
        %v214 = vld [vmem:[%s196 + $0x78] sm:$0xff]
        %v215 = vpack.c.bf16 %v200, %v199
        %v216 = vpack.c.bf16 %v202, %v201
        %v217 = vpack.c.bf16 %v204, %v203
        %v218 = vpack.c.bf16 %v206, %v205
        %v219 = vpack.c.bf16 %v208, %v207
        %v220 = vpack.c.bf16 %v210, %v209
        %v221 = vpack.c.bf16 %v212, %v211
        %v222 = vpack.c.bf16 %v214, %v213
        %v223 = vld [vmem:[%s1] sm:$0xf]
        %v224 = vld [vmem:[%s1 + $0x4] sm:$0xf]
        %v225 = vld [vmem:[%s1 + $0x8] sm:$0xf]
        %v226 = vld [vmem:[%s1 + $0xc] sm:$0xf]
        %v231 = vunpack.c.l.b16 %v223
        %v232 = vunpack.c.l.b16 %v224
        %v233 = vunpack.c.l.b16 %v225
        %v234 = vunpack.c.l.b16 %v226
        %v235 = vpack.c.b16 %v232, %v231
        %v236 = vpack.c.b16 %v234, %v233
        %vm237 = vcmask 261120
        %v239 = vsel %vm237, %v235, 0
        %v242 = vsel %vm237, %v236, 0
        %v245 = vsel %vm237, %v215, 0
        %v248 = vsel %vm237, %v216, 0
        %v251 = vsel %vm237, %v217, 0
        %v254 = vsel %vm237, %v218, 0
        %v257 = vsel %vm237, %v219, 0
        %v260 = vsel %vm237, %v220, 0
        %v263 = vsel %vm237, %v221, 0
        %v266 = vsel %vm237, %v222, 0
        %268 = vmatprep.subr.bf16.mxu0 0
        %269 = vmatpush1.bf16.xpose.msra.mxu0 %v266
        %270 = vmatprep.subr.bf16.mxu0 0
        %271 = vmatpush1.bf16.xpose.msra.mxu0 %v263
        %272 = vmatprep.subr.bf16.mxu0 0
        %273 = vmatpush1.bf16.xpose.msra.mxu0 %v260
        %274 = vmatprep.subr.bf16.mxu0 0
        %275 = vmatpush1.bf16.xpose.msra.mxu0 %v257
        %276 = vmatprep.subr.bf16.mxu0 0
        %277 = vmatpush1.bf16.xpose.msra.mxu0 %v254
        %278 = vmatprep.subr.bf16.mxu0 0
        %279 = vmatpush1.bf16.xpose.msra.mxu0 %v251
        %280 = vmatprep.subr.bf16.mxu0 0
        %281 = vmatpush1.bf16.xpose.msra.mxu0 %v248
        %282 = vmatprep.subr.bf16.mxu0 0
        %283 = vmatpush1.bf16.xpose.msra.mxu0 %v245
        %284 = vmatprep.subr.bf16.mxu0 0
        %285 = vmatpush2.bf16.xpose.msra.mxu0 0
        %286 = vmatprep.subr.bf16.mxu0 0
        %287 = vmatpush2.bf16.xpose.msra.mxu0 0
        %288 = vmatprep.subr.bf16.mxu0 0
        %289 = vmatpush2.bf16.xpose.msra.mxu0 0
        %290 = vmatprep.subr.bf16.mxu0 0
        %291 = vmatpush2.bf16.xpose.msra.mxu0 0
        %292 = vmatprep.subr.bf16.mxu0 0
        %293 = vmatpush2.bf16.xpose.msra.mxu0 0
        %294 = vmatprep.subr.bf16.mxu0 0
        %295 = vmatpush2.bf16.xpose.msra.mxu0 0
        %296 = vmatprep.subr.bf16.mxu0 0
        %297 = vmatpush2.bf16.xpose.msra.mxu0 0
        %298 = vmatprep.subr.bf16.mxu0 0
        %299 = vmatpush2.bf16.xpose.msra.mxu0 0
        %300 = vmatprep.mubr.bf16.mxu0 0
        %301 = vmatmul.mubr.bf16.gmra.mxu0 %v239
        %v302 = vpop.f32.mrf.mxu0
        %v303 = vadd.f32 0.0, %v302
        %v304 = vpop.f32.mrf.mxu0
        %v305 = vpop.f32.mrf.mxu0
        %v306 = vadd.f32 0.0, %v305
        %v307 = vpop.f32.mrf.mxu0
        %308 = vmatprep.mubr.bf16.mxu0 0
        %309 = vmatmul.mubr.bf16.gmra.mxu0 %v242
        %v310 = vpop.f32.mrf.mxu0
        %v311 = vadd.f32 0.0, %v310
        %v312 = vpop.f32.mrf.mxu0
        %v313 = vpop.f32.mrf.mxu0
        %v314 = vadd.f32 0.0, %v313
        %v315 = vpop.f32.mrf.mxu0
        %316 = vdwg.mxu0
        %v317 = vpack.c.bf16 %v306, %v303
        %v318 = vpack.c.bf16 %v314, %v311
        %v319 = vmax.bf16 %v317, 0
        %v320 = vmax.bf16 %v318, 0
        %v321 = vld [vmem:[%s2] sm:$0x3]
        %v323 = vsel %vm237, %v321, 0
        %325 = vmatprep.subr.bf16.mxu0 0
        %326 = vmatpush1.bf16.msra.mxu0 0
        %327 = vmatprep.subr.bf16.mxu0 0
        %328 = vmatpush1.bf16.msra.mxu0 0
        %329 = vmatprep.subr.bf16.mxu0 0
        %330 = vmatpush1.bf16.msra.mxu0 0
        %331 = vmatprep.subr.bf16.mxu0 0
        %332 = vmatpush1.bf16.msra.mxu0 0
        %333 = vmatprep.subr.bf16.mxu0 0
        %334 = vmatpush1.bf16.msra.mxu0 0
        %335 = vmatprep.subr.bf16.mxu0 0
        %336 = vmatpush1.bf16.msra.mxu0 0
        %337 = vmatprep.subr.bf16.mxu0 0
        %338 = vmatpush1.bf16.msra.mxu0 %v320
        %339 = vmatprep.subr.bf16.mxu0 0
        %340 = vmatpush1.bf16.msra.mxu0 %v319
        %341 = vmatprep.subr.bf16.mxu0 0
        %342 = vmatpush2.bf16.msra.mxu0 0
        %343 = vmatprep.subr.bf16.mxu0 0
        %344 = vmatpush2.bf16.msra.mxu0 0
        %345 = vmatprep.subr.bf16.mxu0 0
        %346 = vmatpush2.bf16.msra.mxu0 0
        %347 = vmatprep.subr.bf16.mxu0 0
        %348 = vmatpush2.bf16.msra.mxu0 0
        %349 = vmatprep.subr.bf16.mxu0 0
        %350 = vmatpush2.bf16.msra.mxu0 0
        %351 = vmatprep.subr.bf16.mxu0 0
        %352 = vmatpush2.bf16.msra.mxu0 0
        %353 = vmatprep.subr.bf16.mxu0 0
        %354 = vmatpush2.bf16.msra.mxu0 0
        %355 = vmatprep.subr.bf16.mxu0 0
        %356 = vmatpush2.bf16.msra.mxu0 0
        %357 = vmatprep.mubr.bf16.mxu0 0
        %358 = vmatmul.mubr.bf16.gmra.mxu0 %v323
        %v359 = vpop.f32.mrf.mxu0
        %v360 = vadd.f32 0.0, %v359
        %v361 = vpop.f32.mrf.mxu0
        %v362 = vpop.f32.mrf.mxu0
        %v363 = vpop.f32.mrf.mxu0
        %364 = vdwg.mxu0
        %v365 = vpack.c.bf16 %v360, %v360
        %v366 = vmax.bf16 %v365, 0
        %v367 = vld [vmem:[%s3] sm:$0xf]
        %vm368 = vcmask 31744
        %v370 = vsel %vm368, %v367, 0
        %vm372 = vcmask 1041408
        %v374 = vsel %vm372, %v366, 0
        %376 = vmatprep.subr.bf16.mxu0 0
        %377 = vmatpush1.bf16.msra.mxu0 0
        %378 = vmatprep.subr.bf16.mxu0 0
        %379 = vmatpush1.bf16.msra.mxu0 0
        %380 = vmatprep.subr.bf16.mxu0 0
        %381 = vmatpush1.bf16.msra.mxu0 0
        %382 = vmatprep.subr.bf16.mxu0 0
        %383 = vmatpush1.bf16.msra.mxu0 0
        %384 = vmatprep.subr.bf16.mxu0 0
        %385 = vmatpush1.bf16.msra.mxu0 0
        %386 = vmatprep.subr.bf16.mxu0 0
        %387 = vmatpush1.bf16.msra.mxu0 0
        %388 = vmatprep.subr.bf16.mxu0 0
        %389 = vmatpush1.bf16.msra.mxu0 0
        %390 = vmatprep.subr.bf16.mxu0 0
        %391 = vmatpush1.bf16.msra.mxu0 %v374
        %392 = vmatprep.subr.bf16.mxu0 0
        %393 = vmatpush2.bf16.msra.mxu0 0
        %394 = vmatprep.subr.bf16.mxu0 0
        %395 = vmatpush2.bf16.msra.mxu0 0
        %396 = vmatprep.subr.bf16.mxu0 0
        %397 = vmatpush2.bf16.msra.mxu0 0
        %398 = vmatprep.subr.bf16.mxu0 0
        %399 = vmatpush2.bf16.msra.mxu0 0
        %400 = vmatprep.subr.bf16.mxu0 0
        %401 = vmatpush2.bf16.msra.mxu0 0
        %402 = vmatprep.subr.bf16.mxu0 0
        %403 = vmatpush2.bf16.msra.mxu0 0
        %404 = vmatprep.subr.bf16.mxu0 0
        %405 = vmatpush2.bf16.msra.mxu0 0
        %406 = vmatprep.subr.bf16.mxu0 0
        %407 = vmatpush2.bf16.msra.mxu0 0
        %408 = vmatprep.mubr.bf16.mxu0 0
        %409 = vmatmul.mubr.bf16.gmra.mxu0 %v370
        %v410 = vpop.f32.mrf.mxu0
        %v411 = vadd.f32 0.0, %v410
        %v412 = vpop.f32.mrf.mxu0
        %v413 = vpop.f32.mrf.mxu0
        %v414 = vpop.f32.mrf.mxu0
        %415 = vdwg.mxu0
        %416 = vst [vmem:[%s191] sm:$0xff] %v411
        %s417 = sand.u32 %s115, 1
        %s418 = scalar_lea.sflag [#allocation3], %s417
        %s419 = sand.u32 %s115, 1
        %s420 = smul.addr %s419, 8
        %s421 = scalar_lea.vmem [#allocation2], %s420
        // Predicated region
        $region37: #{my_model_forward.1} parent=35 // pred_check
          %p422 = pneg %p125
        $region38: #{my_model_forward.1} parent=35 // pred_check_branch
          %424 = sbr.rel (%p422) target = $region40
        $region39: #{my_model_forward.1} parent=35 // pred_region
          %s426 = ssub.s32 128, 128
          %427 = vsyncadd %s418, %s426
          %s428 = smul.addr %s18, 128
          %s429 = scalar_lea.hbm %s4, %s428
          %s431 = sshll.u32 %s421, 4
          %s432 = int_to_ptr.vmem [resolvable:$true] %s431
          %434 = dma.vmem_to_hbm [thread:$0]  %s432, 128, %s429, %s418
        $region40: #{my_model_forward.1} parent=35 // pred_fallthru
          _
      $region36: #{my_model_forward.1} parent=5 // pred_fallthru
        _
      %p435 = scmp.le.s32.totalorder 2, %s13
      // Predicated region
      $region41: #{my_model_forward.1} parent=5 // pred_check
        %p436 = pneg %p435
      $region42: #{my_model_forward.1} parent=5 // pred_check_branch
        %438 = sbr.rel (%p436) target = $region44
      $region43: #{my_model_forward.1} parent=5 // pred_region
        %s439 = ssub.s32 %s13, 2
        // Predicated region
        $region45: #{my_model_forward.1} parent=43 // pred_check
          %p440 = pneg %p131
        $region46: #{my_model_forward.1} parent=43 // pred_check_branch
          %442 = sbr.rel (%p440) target = $region48
        $region47: #{my_model_forward.1} parent=43 // pred_region
          %s443 = sand.u32 %s116, 1
          %s444 = scalar_lea.sflag [#allocation3], %s443
          %s445 = sand.u32 %s116, 1
          %s446 = smul.addr %s445, 8
          %s447 = scalar_lea.vmem [#allocation2], %s446
          %448 = dma.done %s444, 128
        $region48: #{my_model_forward.1} parent=43 // pred_fallthru
          _
      $region44: #{my_model_forward.1} parent=5 // pred_fallthru
        _
    $region6: #{my_model_forward.1} parent=1 // loop_footer
      %s17 = sadd.s32 1, %s13
    $region7: #{my_model_forward.1} parent=1 // loop_footer_branch
      %12 = sbr.rel target = $region3
    $region8: #{my_model_forward.1} parent=1 // loop_exit
      _
    %449 = vsyncpa [#allocation3], 1
    %s450 = scalar_lea.sflag [#allocation3], 1
    %451 = vsyncpa %s450, 1

</llo_original>
